<compile_context>
chip_gen: v5e
topology: v5e:2x2
jax: 0.10.0
libtpu: 0.0.40
codegen_flags: <defaults>
</compile_context>

<pallas_src>
import functools

import jax
import jax.numpy as jnp
from jax.experimental import pallas as pl
from jax.experimental.pallas import tpu as pltpu


def _layernorm_kernel(x_ref, g_ref, b_ref, o_ref, *, eps: float):
    # x_ref: (tile_rows, F)   g_ref / b_ref: (1, F)
    x = x_ref[...].astype(jnp.float32)          # no-op when the input is f32
    n = x.shape[-1]
    mean = jnp.sum(x, axis=-1, keepdims=True) * jnp.float32(1.0 / n)
    d = x - mean
    # torch.std is the unbiased estimator (divide by N-1).
    var = jnp.sum(d * d, axis=-1, keepdims=True) * jnp.float32(1.0 / (n - 1))
    std = jnp.sqrt(var)
    denom = std + jnp.float32(eps)
    # EUP approximate reciprocal + one Newton-Raphson step (column-sized,
    # ~free) so the per-element full-tile op is a multiply, not a divide,
    # while keeping full f32 accuracy.
    inv = pl.reciprocal(denom, approx=True)
    inv = inv * (jnp.float32(2.0) - denom * inv)
    g = g_ref[...].astype(jnp.float32)
    b = b_ref[...].astype(jnp.float32)
    # Recompute (x - mean) here instead of reusing `d`, so `d` does not have
    # to stay live (spilled to VMEM) across the reduction/rsqrt section; the
    # extra VALU subtract per element is free in an HBM-bound kernel.
    o_ref[...] = (g * ((x - mean) * inv) + b).astype(o_ref.dtype)


def _round_up(x: int, m: int) -> int:
    return (x + m - 1) // m * m


def _vmem_capacity_bytes() -> int:
    """Per-core VMEM capacity; conservative fallback if the query fails."""
    try:
        cap = getattr(pltpu.get_tpu_info(), "vmem_capacity_bytes", None)
        if cap:
            return int(cap)
    except Exception:
        pass
    return 64 * 1024 * 1024   # v7x per-TC VMEM -- safe on every generation


def layer_norm(x, a_2, b_2, eps=1e-7, tile_rows=512, vmem_budget_bytes=None):
    """x: (..., features); a_2, b_2: (features,).

    tile_rows is a request; the actual tile is the largest multiple of the
    dtype's sublane packing that fits the (generation-aware) VMEM budget.
    """
    orig_shape = x.shape
    features = orig_shape[-1]
    if features < 2:
        raise ValueError("unbiased std (N-1) requires features >= 2")
    x2 = x.reshape(-1, features)
    rows = x2.shape[0]

    itemsize = jnp.dtype(x.dtype).itemsize
    param_itemsize = jnp.dtype(a_2.dtype).itemsize
    # Sublane packing: 8 rows/vreg for f32, 16 for bf16, 32 for int8/fp8.
    packing = max(8, 32 // itemsize)

    # ---- generation-aware VMEM budget / cap --------------------------------
    vmem_cap = _vmem_capacity_bytes()
    vmem_limit_cap = (vmem_cap * 3) // 4           # ~48 MiB v7x, ~96 MiB v5e/v6e
    if vmem_budget_bytes is None:
        vmem_budget_bytes = (vmem_cap * 13) // 20  # ~65%: ~42 MiB v7x, ~83 MiB v5e/v6e

    # ---- working-set model (must track the kernel body) --------------------
    # Input + output tiles are double-buffered by the BlockSpec pipeline; the
    # kernel keeps ~1 full-tile f32 temporary live (plus an f32 cast copy when
    # the input is not already f32).
    f32_temps = 1 if jnp.dtype(x.dtype) == jnp.dtype(jnp.float32) else 2
    per_row_bytes = 2 * (2 * features * itemsize) + f32_temps * features * 4
    const_bytes = 2 * (2 * features * 4)           # gamma / beta (tiny)

    # ---- direct tile-size solve (largest legal multiple of packing) --------
    avail = max(vmem_budget_bytes - const_bytes, per_row_bytes * packing)
    fit_rows = max(packing, ((avail // per_row_bytes) // packing) * packing)
    tr = int(min(_round_up(tile_rows, packing), _round_up(rows, packing), fit_rows))
    tr = max(tr, packing)

    g = a_2.reshape(1, features)
    b = b_2.reshape(1, features)

    grid = (pl.cdiv(rows, tr),)
    tile_total = tr * per_row_bytes + const_bytes
    vmem_limit = int(min(max(tile_total + (4 << 20), 32 << 20), vmem_limit_cap))

    # Advisory hint so XLA schedules/overlaps surrounding ops correctly around
    # this bandwidth-bound custom call.
    cost = pl.CostEstimate(
        flops=6 * rows * features,
        transcendentals=2 * rows,
        bytes_accessed=2 * rows * features * itemsize + 2 * features * param_itemsize,
    )

    out = pl.pallas_call(
        functools.partial(_layernorm_kernel, eps=eps),
        out_shape=jax.ShapeDtypeStruct((rows, features), x.dtype),
        grid_spec=pltpu.PrefetchScalarGridSpec(
            num_scalar_prefetch=0,
            grid=grid,
            in_specs=[
                # TODO(synk): if v7x profiles still show exposed DMA, add
                # pipeline_mode=pl.Buffered(3) here and bump this operand's io
                # term in per_row_bytes from 2x to 3x buffers.
                pl.BlockSpec((tr, features), lambda i: (i, 0)),
                pl.BlockSpec((1, features), lambda i: (0, 0)),
                pl.BlockSpec((1, features), lambda i: (0, 0)),
            ],
            out_specs=pl.BlockSpec((tr, features), lambda i: (i, 0)),
        ),
        compiler_params=pltpu.CompilerParams(
            # TODO(synk): on v7x, confirm in the profile that both TensorCores
            # are active; if only one TC runs, switch this row axis to
            # pltpu.CORE_PARALLEL (or split rows via create_tensorcore_mesh +
            # pl.core_map) -- up to ~2x for this HBM-bound kernel.
            dimension_semantics=("parallel",),
            vmem_limit_bytes=vmem_limit,
        ),
        cost_estimate=cost,
    )(x2, g, b)

    return out.reshape(orig_shape)


if __name__ == "__main__":
    key = jax.random.PRNGKey(0)
    batch, seq, hidden = 2, 8, 32

    x = jax.random.normal(key, (batch, seq, hidden), dtype=jnp.float32)

    # Deterministic parameter init, matching nn.Parameter(torch.ones/zeros).
    a_2 = jnp.ones((hidden,), dtype=jnp.float32)
    b_2 = jnp.zeros((hidden,), dtype=jnp.float32)

    out = layer_norm(x, a_2, b_2, eps=1e-7)
    out = jax.block_until_ready(out)

    # Sanity check against a pure-JAX reference (same unbiased-std semantics).
    mean = jnp.mean(x, axis=-1, keepdims=True)
    std = jnp.sqrt(jnp.sum((x - mean) ** 2, axis=-1, keepdims=True) / (hidden - 1))
    ref = a_2 * (x - mean) / (std + 1e-7) + b_2
    assert jnp.allclose(out, ref, atol=1e-5, rtol=1e-5), "mismatch vs reference"

    print("KERNEL_OK")
</pallas_src>

<mosaic_0001>
module attributes {stable_mosaic.version = 11 : i64} {
  func.func @_layernorm_kernel(%arg0: i32, %arg1: memref<16x32xf32, #tpu.memory_space<vmem>>, %arg2: memref<1x32xf32, #tpu.memory_space<vmem>>, %arg3: memref<1x32xf32, #tpu.memory_space<vmem>>, %arg4: memref<16x32xf32, #tpu.memory_space<vmem>>) attributes {dimension_semantics = [#tpu.dimension_semantics<parallel>], iteration_bounds = array<i64: 1>, scalar_prefetch = 0 : i64, scratch_operands = 0 : i64, tpu.core_type = #tpu.core_type<tc>, window_params = [{transform_indices = @transform_0, window_bounds = array<i64: 16, 32>}, {pipeline_mode = #tpu.pipeline_mode<synchronous>, transform_indices = @transform_1, window_bounds = array<i64: 1, 32>}, {pipeline_mode = #tpu.pipeline_mode<synchronous>, transform_indices = @transform_2, window_bounds = array<i64: 1, 32>}, {transform_indices = @transform_3, window_bounds = array<i64: 16, 32>}]} {
    %c0 = arith.constant 0 : index
    %c0_0 = arith.constant 0 : index
    %0 = vector.load %arg1[%c0, %c0_0] : memref<16x32xf32, #tpu.memory_space<vmem>>, vector<16x32xf32>
    %cst = arith.constant dense<0.000000e+00> : vector<16xf32>
    %1 = vector.multi_reduction <add>, %0, %cst [1] : vector<16x32xf32> to vector<16xf32>
    %2 = vector.shape_cast %1 : vector<16xf32> to vector<16x1xf32>
    %cst_1 = arith.constant 3.125000e-02 : f32
    %3 = vector.broadcast %cst_1 : f32 to vector<16x1xf32>
    %4 = arith.mulf %2, %3 : vector<16x1xf32>
    %5 = vector.broadcast %4 : vector<16x1xf32> to vector<16x32xf32>
    %6 = arith.subf %0, %5 : vector<16x32xf32>
    %7 = arith.mulf %6, %6 : vector<16x32xf32>
    %cst_2 = arith.constant dense<0.000000e+00> : vector<16xf32>
    %8 = vector.multi_reduction <add>, %7, %cst_2 [1] : vector<16x32xf32> to vector<16xf32>
    %9 = vector.shape_cast %8 : vector<16xf32> to vector<16x1xf32>
    %cst_3 = arith.constant 0.0322580636 : f32
    %10 = vector.broadcast %cst_3 : f32 to vector<16x1xf32>
    %11 = arith.mulf %9, %10 : vector<16x1xf32>
    %12 = math.sqrt %11 : vector<16x1xf32>
    %cst_4 = arith.constant 1.000000e-07 : f32
    %13 = vector.broadcast %cst_4 : f32 to vector<16x1xf32>
    %14 = arith.addf %12, %13 : vector<16x1xf32>
    %15 = tpu.reciprocal %14 {approx = true} : vector<16x1xf32> -> vector<16x1xf32>
    %16 = arith.mulf %14, %15 : vector<16x1xf32>
    %cst_5 = arith.constant 2.000000e+00 : f32
    %17 = vector.broadcast %cst_5 : f32 to vector<16x1xf32>
    %18 = arith.subf %17, %16 : vector<16x1xf32>
    %19 = arith.mulf %15, %18 : vector<16x1xf32>
    %c0_6 = arith.constant 0 : index
    %c0_7 = arith.constant 0 : index
    %20 = vector.load %arg2[%c0_6, %c0_7] : memref<1x32xf32, #tpu.memory_space<vmem>>, vector<1x32xf32>
    %c0_8 = arith.constant 0 : index
    %c0_9 = arith.constant 0 : index
    %21 = vector.load %arg3[%c0_8, %c0_9] : memref<1x32xf32, #tpu.memory_space<vmem>>, vector<1x32xf32>
    %22 = vector.broadcast %4 : vector<16x1xf32> to vector<16x32xf32>
    %23 = arith.subf %0, %22 : vector<16x32xf32>
    %24 = vector.broadcast %19 : vector<16x1xf32> to vector<16x32xf32>
    %25 = arith.mulf %23, %24 : vector<16x32xf32>
    %26 = vector.broadcast %20 : vector<1x32xf32> to vector<16x32xf32>
    %27 = arith.mulf %26, %25 : vector<16x32xf32>
    %28 = vector.broadcast %21 : vector<1x32xf32> to vector<16x32xf32>
    %29 = arith.addf %27, %28 : vector<16x32xf32>
    %c0_10 = arith.constant 0 : index
    %c0_11 = arith.constant 0 : index
    %30 = vector.load %arg4[%c0_10, %c0_11] : memref<16x32xf32, #tpu.memory_space<vmem>>, vector<16x32xf32>
    tpu.vector_store %arg4[%c0_10, %c0_11], %29 {strides = array<i32>} : memref<16x32xf32, #tpu.memory_space<vmem>>, vector<16x32xf32>,
    return
  }
  func.func @transform_0(%arg0: i32) -> (i32, i32) {
    %c0_i32 = arith.constant 0 : i32
    %c0_i32_0 = arith.constant 0 : i32
    return %arg0, %c0_i32 : i32, i32
  }
  func.func @transform_1(%arg0: i32) -> (i32, i32) {
    %c0_i32 = arith.constant 0 : i32
    %c0_i32_0 = arith.constant 0 : i32
    %c0_i32_1 = arith.constant 0 : i32
    return %c0_i32, %c0_i32_0 : i32, i32
  }
  func.func @transform_2(%arg0: i32) -> (i32, i32) {
    %c0_i32 = arith.constant 0 : i32
    %c0_i32_0 = arith.constant 0 : i32
    %c0_i32_1 = arith.constant 0 : i32
    return %c0_i32, %c0_i32_0 : i32, i32
  }
  func.func @transform_3(%arg0: i32) -> (i32, i32) {
    %c0_i32 = arith.constant 0 : i32
    %c0_i32_0 = arith.constant 0 : i32
    return %arg0, %c0_i32 : i32, i32
  }
}

</mosaic_0001>

<llo_original>
// kernel: tpu_custom_call.1
$region0: #{tpu_custom_call.1}
  #allocation0 [shape = 'u32[]', space=smem, size = 0x4, offset = 0x4, fixed_abs, tag = 'smem constant byte address 0x4 - core index']
  #allocation1 [shape = 'u32[72,128]{1,0:T(1,128)}', space=vmem, size = 0x9000, scoped, tag = 'internal scratch']
  %s0 = inlined_call_operand.hbm [shape: f32[16,32], index: 0, kind: input, shape index: {}]
  %s1 = inlined_call_operand.hbm [shape: f32[1,32], index: 1, kind: input, shape index: {}]
  %s2 = inlined_call_operand.vmem [shape: f32[1,32], index: 2, kind: input, shape index: {}]
  %s3 = inlined_call_operand.hbm [shape: f32[16,32], index: 3, kind: output, shape index: {}]
  %s4 = sld [smem:[#allocation0]]
  $region30: #{tpu_custom_call.1} parent=0
    _
  %s6 = ssub.s32 1, %s4
  %s7 = scalar_select 0, %s6, %s4
  $region1: #{tpu_custom_call.1} parent=0
    #allocation2 [shape = 'u8[8192]{0}', space=vmem, size = 0x2000, scoped, tag = 'input window, operand 0, single buffered']
    #allocation3 [shape = 's32[1]{0}', space=sflag, size = 0x4, scoped, tag = 'scoped memory for tpu_custom_call.1']
    #allocation4 [shape = 's32[1]{0}', space=sflag, size = 0x4, scoped, tag = 'scoped memory for tpu_custom_call.1']
    #allocation5 [shape = 'u8[512]{0}', space=vmem, size = 0x400, scoped, tag = 'input window, operand 1, single buffered']
    #allocation6 [shape = 's32[1]{0}', space=sflag, size = 0x4, scoped, tag = 'scoped memory for tpu_custom_call.1']
    #allocation7 [shape = 'u8[8192]{0}', space=vmem, size = 0x2000, scoped, tag = 'output window, operand 0, single buffered']
    %8 = vsyncpa [#allocation3], 0
    %9 = vsyncpa [#allocation6], 0
    %10 = vsyncpa [#allocation4], 0
    // Predicated region
    $region2: #{tpu_custom_call.1} parent=1 // pred_check
      _
    $region3: #{tpu_custom_call.1} parent=1 // pred_check_branch
      %12 = sbr.rel (0) target = $region5
    $region4: #{tpu_custom_call.1} parent=1 // pred_region
      %14 = vsyncadd [#allocation3], 0
      %s15 = sshll.u32 %s0, 4
      %s16 = int_to_ptr.hbm [resolvable:$true] %s15
      %s17 = sshll.u32 [#allocation2], 4
      %s18 = int_to_ptr.vmem [resolvable:$true] %s17
      %23 = dma.hbm_to_vmem [thread:$0]  %s16, 256, %s18, [#allocation3], 128, 128, 8
    $region5: #{tpu_custom_call.1} parent=1 // pred_fallthru
      _
    // Predicated region
    $region6: #{tpu_custom_call.1} parent=1 // pred_check
      _
    $region7: #{tpu_custom_call.1} parent=1 // pred_check_branch
      %25 = sbr.rel (0) target = $region9
    $region8: #{tpu_custom_call.1} parent=1 // pred_region
      %27 = vsyncadd [#allocation6], 0
      %s29 = sshll.u32 %s1, 4
      %s30 = int_to_ptr.hbm [resolvable:$true] %s29
      %s31 = sshll.u32 [#allocation5], 4
      %s32 = int_to_ptr.vmem [resolvable:$true] %s31
      %34 = dma.hbm_to_vmem [thread:$0]  %s30, 16, %s32, [#allocation6]
    $region9: #{tpu_custom_call.1} parent=1 // pred_fallthru
      _
    // Predicated region
    $region10: #{tpu_custom_call.1} parent=1 // pred_check
      _
    $region11: #{tpu_custom_call.1} parent=1 // pred_check_branch
      %36 = sbr.rel (0) target = $region13
    $region12: #{tpu_custom_call.1} parent=1 // pred_region
      _
    $region13: #{tpu_custom_call.1} parent=1 // pred_fallthru
      _
    // Predicated region
    $region14: #{tpu_custom_call.1} parent=1 // pred_check
      _
    $region15: #{tpu_custom_call.1} parent=1 // pred_check_branch
      %38 = sbr.rel (0) target = $region17
    $region16: #{tpu_custom_call.1} parent=1 // pred_region
      %40 = dma.done [#allocation3], 256
    $region17: #{tpu_custom_call.1} parent=1 // pred_fallthru
      _
    // Predicated region
    $region18: #{tpu_custom_call.1} parent=1 // pred_check
      _
    $region19: #{tpu_custom_call.1} parent=1 // pred_check_branch
      %42 = sbr.rel (0) target = $region21
    $region20: #{tpu_custom_call.1} parent=1 // pred_region
      %44 = dma.done [#allocation6], 16
    $region21: #{tpu_custom_call.1} parent=1 // pred_fallthru
      _
    %v45 = vld [vmem:[#allocation2] sm:$0xff]
    %v46 = vld [vmem:[#allocation2 + $0x8] sm:$0xff]
    %vm47 = vcmask 261120
    %v48 = vsel %vm47, %v45, 0.0
    %49 = vadd.xlane.f32.xlu0 %v48
    %v50 = vpop.xlane.xlu0 %49
    %v51 = vsel %vm47, %v46, 0.0
    %52 = vadd.xlane.f32.xlu0 %v51
    %v53 = vpop.xlane.xlu0 %52
    %v54 = vmul.f32 %v50, 0.03125
    %v55 = vmul.f32 %v53, 0.03125
    %v56 = vsub.f32 %v45, %v54
    %v57 = vsub.f32 %v46, %v55
    %v58 = vmul.f32 %v56, %v56
    %v59 = vmul.f32 %v57, %v57
    %v60 = vsel %vm47, %v58, 0.0
    %61 = vadd.xlane.f32.xlu0 %v60
    %v62 = vpop.xlane.xlu0 %61
    %v63 = vsel %vm47, %v59, 0.0
    %64 = vadd.xlane.f32.xlu0 %v63
    %v65 = vpop.xlane.xlu0 %64
    %v66 = vmul.f32 %v62, 0.032258064
    %v67 = vmul.f32 %v65, 0.032258064
    %v68 = vrsqrt.pop %v66
    %v69 = vmul.f32 %v68, %v66
    %v70 = vmul.f32 %v69, %v68
    %v71 = vmul.f32 0.5, %v70
    %v72 = vsub.f32 1.5, %v71
    %v73 = vmul.f32 %v68, %v72
    %v74 = vmul.f32 %v66, %v73
    %vm75 = vcmp.eq.f32.partialorder %v66, inf
    %v76 = vsel %vm75, %v66, %v74
    %vm77 = vcmp.eq.f32.partialorder %v66, 0.0
    %v78 = vand.u32 %v66, 2147483648
    %v79 = vsel %vm77, %v78, %v76
    %v80 = vrsqrt.pop %v67
    %v81 = vmul.f32 %v80, %v67
    %v82 = vmul.f32 %v81, %v80
    %v83 = vmul.f32 0.5, %v82
    %v84 = vsub.f32 1.5, %v83
    %v85 = vmul.f32 %v80, %v84
    %v86 = vmul.f32 %v67, %v85
    %vm87 = vcmp.eq.f32.partialorder %v67, inf
    %v88 = vsel %vm87, %v67, %v86
    %vm89 = vcmp.eq.f32.partialorder %v67, 0.0
    %v90 = vand.u32 %v67, 2147483648
    %v91 = vsel %vm89, %v90, %v88
    %v92 = vadd.f32 %v79, 1e-07
    %v93 = vadd.f32 %v91, 1e-07
    %v94 = vrcp.pop %v92
    %v95 = vrcp.pop %v93
    %v96 = vmul.f32 %v92, %v94
    %v97 = vmul.f32 %v93, %v95
    %v98 = vsub.f32 2.0, %v96
    %v99 = vsub.f32 2.0, %v97
    %v100 = vmul.f32 %v94, %v98
    %v101 = vmul.f32 %v95, %v99
    %v102 = vld [vmem:[#allocation5] sm:$0x1]
    %v103 = vld [vmem:[%s2] sm:$0x1]
    %v104 = vmul.f32 %v56, %v100
    %v105 = vmul.f32 %v57, %v101
    %v107 = vperm.slane %v102, 0
    %v109 = vmul.f32 %v107, %v104
    %v110 = vmul.f32 %v107, %v105
    %v112 = vperm.slane %v103, 0
    %v114 = vadd.f32 %v109, %v112
    %v115 = vadd.f32 %v110, %v112
    %116 = vst.msk [vmem:[#allocation7] sm:$0xff] %vm47, %v114
    %117 = vst.msk [vmem:[#allocation7 + $0x8] sm:$0xff] %vm47, %v115
    // Predicated region
    $region22: #{tpu_custom_call.1} parent=1 // pred_check
      _
    $region23: #{tpu_custom_call.1} parent=1 // pred_check_branch
      %119 = sbr.rel (0) target = $region25
    $region24: #{tpu_custom_call.1} parent=1 // pred_region
      %121 = vsyncadd [#allocation4], 0
      %s122 = sshll.u32 [#allocation7], 4
      %s123 = int_to_ptr.vmem [resolvable:$true] %s122
      %s124 = sshll.u32 %s3, 4
      %s125 = int_to_ptr.hbm [resolvable:$true] %s124
      %130 = dma.vmem_to_hbm [thread:$0]  %s123, 256, %s125, [#allocation4], 128, 128, 8
    $region25: #{tpu_custom_call.1} parent=1 // pred_fallthru
      _
    // Predicated region
    $region26: #{tpu_custom_call.1} parent=1 // pred_check
      _
    $region27: #{tpu_custom_call.1} parent=1 // pred_check_branch
      %132 = sbr.rel (0) target = $region29
    $region28: #{tpu_custom_call.1} parent=1 // pred_region
      %134 = dma.done [#allocation4], 256
    $region29: #{tpu_custom_call.1} parent=1 // pred_fallthru
      _
    %135 = vsyncpa [#allocation3], 1
    %136 = vsyncpa [#allocation6], 1
    %137 = vsyncpa [#allocation4], 1

</llo_original>
